<compile_context>
chip_gen: v7x
topology: tpu7x:2x2x1
jax: 0.10.0
libtpu: 0.0.40
codegen_flags: <defaults>
</compile_context>

<pallas_src>
import functools

import jax
import jax.numpy as jnp
from jax.experimental import pallas as pl
from jax.experimental.pallas import tpu as pltpu


def _wl2_kernel(preds_ref, targets_ref, loss_ref, tnorm_ref, *, beta, eps):
    # preds_ref / targets_ref: lane-dense VMEM tiles of shape (B_BLK, M), M = n1*n2*c.
    t = targets_ref[...].astype(jnp.float32)
    p = preds_ref[...].astype(jnp.float32)

    # targets.pow(2).mean(dim=(1, 2)) + eps   (c == 1, so the flattened mean is identical)
    tnorm = jnp.mean(t * t, axis=-1, keepdims=True) + eps          # (B_BLK, 1)

    # beta * (preds - targets).pow(2).mean(dim=(1, 2)) / target_norm
    diff = p - t
    err = jnp.mean(diff * diff, axis=-1, keepdims=True)            # (B_BLK, 1)

    tnorm_ref[...] = tnorm
    loss_ref[...] = beta * err / tnorm


def weighted_l2_loss_2d(preds, targets, *, beta=1.0, eps=1e-10,
                        metric_reduction="L1", return_norm=True,
                        batch_block=None):
    """Default-path forward of WeightedL2Loss2d (preds_prime/targets_prime/weights/K = None)."""
    # TODO(synk): the noise branch (torch.rand_like), the alpha>0 preds_prime branch and the
    # regularizer branch (torch.gradient) are unreachable with the module defaults and are omitted.
    N, n1, n2, c = preds.shape
    assert c == 1 and targets.shape == preds.shape
    M = n1 * n2 * c

    # Lane-dense layout: flatten spatial/channel dims onto the last (lane) axis.
    p = preds.reshape(N, M)
    t = targets.reshape(N, M)
    itemsize = jnp.dtype(p.dtype).itemsize

    # Batch block sized so 2 inputs x 2 pipeline buffers stay under ~48 MiB
    # (fits v7x's 64 MiB VMEM; v5e/v6e have 128 MiB).
    if batch_block is None:
        budget = 48 * 1024 * 1024
        cap = budget // (4 * M * itemsize)
        if N <= cap:
            batch_block = N                         # single big block == full batch
        else:
            batch_block = max(8, (cap // 8) * 8)    # sublane-aligned multiple of 8
    batch_block = int(batch_block)

    n_blocks = pl.cdiv(N, batch_block)
    N_pad = n_blocks * batch_block
    if N_pad != N:
        # Zero padding: padded rows give err=0, tnorm=eps -> loss=0, and are sliced off below.
        pad = ((0, N_pad - N), (0, 0))
        p = jnp.pad(p, pad)
        t = jnp.pad(t, pad)

    # Raise the scoped-VMEM limit for the double-buffered input slabs (2 inputs x 2 buffers),
    # but keep it <= 56 MiB so it is valid on v7x's 64 MiB physical VMEM.
    footprint = 4 * batch_block * M * itemsize
    vmem_limit = int(min(max(2 * footprint, 32 << 20), 56 << 20))

    kernel = functools.partial(_wl2_kernel, beta=float(beta), eps=float(eps))
    loss_pad, tnorm_pad = pl.pallas_call(
        kernel,
        out_shape=(
            jax.ShapeDtypeStruct((N_pad, 1), jnp.float32),  # per-sample relative squared error
            jax.ShapeDtypeStruct((N_pad, 1), jnp.float32),  # per-sample target_norm (L2)
        ),
        grid_spec=pltpu.PrefetchScalarGridSpec(
            num_scalar_prefetch=0,
            grid=(n_blocks,),
            in_specs=[
                pl.BlockSpec((batch_block, M), lambda b: (b, 0)),
                pl.BlockSpec((batch_block, M), lambda b: (b, 0)),
            ],
            out_specs=(
                pl.BlockSpec((batch_block, 1), lambda b: (b, 0)),
                pl.BlockSpec((batch_block, 1), lambda b: (b, 0)),
            ),
        ),
        compiler_params=pltpu.CompilerParams(
            dimension_semantics=("parallel",),   # independent batch blocks -> 2 TCs on v7x
            vmem_limit_bytes=vmem_limit,
        ),
    )(p, t)

    loss_b = loss_pad[:N]
    target_norm = tnorm_pad[:N]

    sqrt_loss = jnp.sqrt(loss_b)
    if metric_reduction == "L2":
        metric = jnp.sqrt(jnp.mean(loss_b))
    elif metric_reduction == "L1":
        metric = jnp.mean(sqrt_loss)
    elif metric_reduction == "Linf":
        metric = jnp.max(sqrt_loss)
    else:
        raise ValueError(metric_reduction)

    loss = jnp.mean(sqrt_loss) if return_norm else jnp.mean(loss_b)
    regularizer = jnp.zeros((1,), dtype=jnp.float32)  # regularizer=False path
    norms = dict(L2=target_norm, H1=1)                # targets_prime is None -> H1 = 1
    # NOTE: metric is returned as a device array (no float()) so callers can jax.jit this.
    return loss, regularizer, metric, norms


def _reference(preds, targets, beta=1.0, eps=1e-10):
    """Plain-JAX reference replicating the PyTorch default path."""
    tn = jnp.mean(targets ** 2, axis=(1, 2)) + eps                      # (N, 1)
    lb = beta * jnp.mean((preds - targets) ** 2, axis=(1, 2)) / tn      # (N, 1)
    loss = jnp.mean(jnp.sqrt(lb))
    metric = jnp.mean(jnp.sqrt(lb))
    return loss, lb, tn, metric


if __name__ == "__main__":
    key = jax.random.PRNGKey(0)
    k1, k2, k3, k4 = jax.random.split(key, 4)

    # --- Test 1: small batch, auto block size (single grid step), jitted wrapper ---
    N, n = 2, 16
    preds = jax.random.normal(k1, (N, n, n, 1), dtype=jnp.float32)
    targets = jax.random.normal(k2, (N, n, n, 1), dtype=jnp.float32)

    loss, regularizer, metric, norms = jax.jit(weighted_l2_loss_2d)(preds, targets)
    jax.block_until_ready((loss, regularizer, metric, norms["L2"]))

    ref_loss, ref_lb, ref_tn, ref_metric = _reference(preds, targets)
    assert jnp.allclose(loss, ref_loss, rtol=1e-5, atol=1e-6)
    assert jnp.allclose(norms["L2"], ref_tn, rtol=1e-5, atol=1e-6)
    assert jnp.allclose(metric, ref_metric, rtol=1e-5, atol=1e-6)
    assert float(regularizer[0]) == 0.0 and int(norms["H1"]) == 1

    # --- Test 2: N not a multiple of the batch block (exercises padding + multi-block grid) ---
    N2 = 10
    preds2 = jax.random.normal(k3, (N2, n, n, 1), dtype=jnp.float32)
    targets2 = jax.random.normal(k4, (N2, n, n, 1), dtype=jnp.float32)

    loss2, _, metric2, norms2 = weighted_l2_loss_2d(preds2, targets2, batch_block=8)
    jax.block_until_ready((loss2, metric2, norms2["L2"]))

    ref_loss2, _, ref_tn2, ref_metric2 = _reference(preds2, targets2)
    assert jnp.allclose(loss2, ref_loss2, rtol=1e-5, atol=1e-6)
    assert jnp.allclose(norms2["L2"], ref_tn2, rtol=1e-5, atol=1e-6)
    assert jnp.allclose(metric2, ref_metric2, rtol=1e-5, atol=1e-6)

    print("KERNEL_OK")
</pallas_src>

<mosaic_0001>
module attributes {stable_mosaic.version = 11 : i64} {
  func.func @_wl2_kernel(%arg0: i32, %arg1: memref<2x256xf32, #tpu.memory_space<vmem>>, %arg2: memref<2x256xf32, #tpu.memory_space<vmem>>, %arg3: memref<2x1xf32, #tpu.memory_space<vmem>>, %arg4: memref<2x1xf32, #tpu.memory_space<vmem>>) attributes {dimension_semantics = [#tpu.dimension_semantics<parallel>], iteration_bounds = array<i64: 1>, scalar_prefetch = 0 : i64, scratch_operands = 0 : i64, tpu.core_type = #tpu.core_type<tc>, window_params = [{transform_indices = @transform_0, window_bounds = array<i64: 2, 256>}, {transform_indices = @transform_1, window_bounds = array<i64: 2, 256>}, {transform_indices = @transform_2, window_bounds = array<i64: 2, 1>}, {transform_indices = @transform_3, window_bounds = array<i64: 2, 1>}]} {
    %c0 = arith.constant 0 : index
    %c0_0 = arith.constant 0 : index
    %0 = vector.load %arg2[%c0, %c0_0] : memref<2x256xf32, #tpu.memory_space<vmem>>, vector<2x256xf32>
    %c0_1 = arith.constant 0 : index
    %c0_2 = arith.constant 0 : index
    %1 = vector.load %arg1[%c0_1, %c0_2] : memref<2x256xf32, #tpu.memory_space<vmem>>, vector<2x256xf32>
    %2 = arith.mulf %0, %0 : vector<2x256xf32>
    %cst = arith.constant dense<0.000000e+00> : vector<2xf32>
    %3 = vector.multi_reduction <add>, %2, %cst [1] : vector<2x256xf32> to vector<2xf32>
    %4 = vector.shape_cast %3 : vector<2xf32> to vector<2x1xf32>
    %cst_3 = arith.constant 2.560000e+02 : f32
    %5 = vector.broadcast %cst_3 : f32 to vector<2x1xf32>
    %6 = arith.divf %4, %5 : vector<2x1xf32>
    %cst_4 = arith.constant 1.000000e-10 : f32
    %7 = vector.broadcast %cst_4 : f32 to vector<2x1xf32>
    %8 = arith.addf %6, %7 : vector<2x1xf32>
    %9 = arith.subf %1, %0 : vector<2x256xf32>
    %10 = arith.mulf %9, %9 : vector<2x256xf32>
    %cst_5 = arith.constant dense<0.000000e+00> : vector<2xf32>
    %11 = vector.multi_reduction <add>, %10, %cst_5 [1] : vector<2x256xf32> to vector<2xf32>
    %12 = vector.shape_cast %11 : vector<2xf32> to vector<2x1xf32>
    %cst_6 = arith.constant 2.560000e+02 : f32
    %13 = vector.broadcast %cst_6 : f32 to vector<2x1xf32>
    %14 = arith.divf %12, %13 : vector<2x1xf32>
    %c0_7 = arith.constant 0 : index
    %c0_8 = arith.constant 0 : index
    %15 = vector.load %arg4[%c0_7, %c0_8] : memref<2x1xf32, #tpu.memory_space<vmem>>, vector<2x1xf32>
    tpu.vector_store %arg4[%c0_7, %c0_8], %8 {strides = array<i32>} : memref<2x1xf32, #tpu.memory_space<vmem>>, vector<2x1xf32>,
    %cst_9 = arith.constant 1.000000e+00 : f32
    %16 = vector.broadcast %cst_9 : f32 to vector<2x1xf32>
    %17 = arith.mulf %16, %14 : vector<2x1xf32>
    %18 = arith.divf %17, %8 : vector<2x1xf32>
    %c0_10 = arith.constant 0 : index
    %c0_11 = arith.constant 0 : index
    %19 = vector.load %arg3[%c0_10, %c0_11] : memref<2x1xf32, #tpu.memory_space<vmem>>, vector<2x1xf32>
    tpu.vector_store %arg3[%c0_10, %c0_11], %18 {strides = array<i32>} : memref<2x1xf32, #tpu.memory_space<vmem>>, vector<2x1xf32>,
    return
  }
  func.func @transform_0(%arg0: i32) -> (i32, i32) {
    %c0_i32 = arith.constant 0 : i32
    %c0_i32_0 = arith.constant 0 : i32
    return %arg0, %c0_i32 : i32, i32
  }
  func.func @transform_1(%arg0: i32) -> (i32, i32) {
    %c0_i32 = arith.constant 0 : i32
    %c0_i32_0 = arith.constant 0 : i32
    return %arg0, %c0_i32 : i32, i32
  }
  func.func @transform_2(%arg0: i32) -> (i32, i32) {
    %c0_i32 = arith.constant 0 : i32
    %c0_i32_0 = arith.constant 0 : i32
    return %arg0, %c0_i32 : i32, i32
  }
  func.func @transform_3(%arg0: i32) -> (i32, i32) {
    %c0_i32 = arith.constant 0 : i32
    %c0_i32_0 = arith.constant 0 : i32
    return %arg0, %c0_i32 : i32, i32
  }
}

</mosaic_0001>

<llo_original>
// kernel: weighted_l2_loss_2d.1
$region0: #{weighted_l2_loss_2d.1}
  #allocation0 [shape = 'u32[]', space=smem, size = 0x4, offset = 0x4, fixed_abs, tag = 'smem constant byte address 0x4 - core index']
  #allocation1 [shape = 'u32[144,128]{1,0:T(1,128)}', space=vmem, size = 0x12000, scoped, tag = 'internal scratch']
  %s0 = inlined_call_operand.vmem [shape: f32[2,256], index: 0, kind: input, shape index: {}]
  %s1 = inlined_call_operand.vmem [shape: f32[2,256], index: 1, kind: input, shape index: {}]
  %s2 = inlined_call_operand.vmem [shape: f32[2,1], index: 2, kind: output, shape index: {0}]
  %s3 = inlined_call_operand.vmem [shape: f32[2,1], index: 3, kind: output, shape index: {1}]
  %4 = xla_tuple %s2, %s3
  %s5 = sld [smem:[#allocation0]]
  $region26: #{weighted_l2_loss_2d.1} parent=0
    _
  %s7 = ssub.s32 1, %s5
  %s8 = scalar_select 0, %s7, %s5
  // Predicated region
  $region2: #{weighted_l2_loss_2d.1} parent=0 // pred_check
    _
  $region3: #{weighted_l2_loss_2d.1} parent=0 // pred_check_branch
    %10 = sbr.rel (0) target = $region5
  $region4: #{weighted_l2_loss_2d.1} parent=0 // pred_region
    _
  $region5: #{weighted_l2_loss_2d.1} parent=0 // pred_fallthru
    _
  // Predicated region
  $region6: #{weighted_l2_loss_2d.1} parent=0 // pred_check
    _
  $region7: #{weighted_l2_loss_2d.1} parent=0 // pred_check_branch
    %12 = sbr.rel (0) target = $region9
  $region8: #{weighted_l2_loss_2d.1} parent=0 // pred_region
    _
  $region9: #{weighted_l2_loss_2d.1} parent=0 // pred_fallthru
    _
  %v13 = vld [vmem:[%s1] sm:$0xf]
  %v14 = vld [vmem:[%s0] sm:$0xf]
  %v15 = vmul.f32 %v13, %v13
  %v18 = vunpack.c.l.s4 1983009808
  %v19 = vunpack.c.0.s8 %v18
  %v20 = vlaneseq
  %v21 = vshrl.u32 %v20, 7
  %v22 = vsub.s32 %v19, %v21
  %v23 = vrot.slane %v15, %v22
  %v24 = vcombine.high %v23, %v23
  %vm27 = vcmask 1041408
  %v28 = vsel %vm27, %v23, 0.0
  %v29 = vsel %vm27, %v24, 0.0
  %v30 = vadd.f32 %v28, %v29
  %31 = vadd.xlane.f32.xlu0 %v30
  %v32 = vpop.xlane.xlu0 %31
  %v33 = vrcp.pop 256.0
  %v34 = vmul.f32 %v32, %v33
  %v35 = vadd.f32 %v34, 1e-10
  %v36 = vsub.f32 %v14, %v13
  %v37 = vmul.f32 %v36, %v36
  %v40 = vunpack.c.l.s4 1983009808
  %v41 = vunpack.c.0.s8 %v40
  %v42 = vlaneseq
  %v43 = vshrl.u32 %v42, 7
  %v44 = vsub.s32 %v41, %v43
  %v45 = vrot.slane %v37, %v44
  %v46 = vcombine.high %v45, %v45
  %v49 = vsel %vm27, %v45, 0.0
  %v50 = vsel %vm27, %v46, 0.0
  %v51 = vadd.f32 %v49, %v50
  %52 = vadd.xlane.f32.xlu0 %v51
  %v53 = vpop.xlane.xlu0 %52
  %v54 = vmul.f32 %v53, %v33
  %vm55 = vcmask 1024
  %56 = vst.msk [vmem:[%s3] sm:$0x3] %vm55, %v35
  %v57 = vrcp.pop %v35
  %v58 = vmul.f32 %v54, %v57
  %59 = vst.msk [vmem:[%s2] sm:$0x3] %vm55, %v58
  // Predicated region
  $region10: #{weighted_l2_loss_2d.1} parent=0 // pred_check
    _
  $region11: #{weighted_l2_loss_2d.1} parent=0 // pred_check_branch
    %61 = sbr.rel (0) target = $region13
  $region12: #{weighted_l2_loss_2d.1} parent=0 // pred_region
    _
  $region13: #{weighted_l2_loss_2d.1} parent=0 // pred_fallthru
    _
  // Predicated region
  $region14: #{weighted_l2_loss_2d.1} parent=0 // pred_check
    _
  $region15: #{weighted_l2_loss_2d.1} parent=0 // pred_check_branch
    %63 = sbr.rel (0) target = $region17
  $region16: #{weighted_l2_loss_2d.1} parent=0 // pred_region
    _
  $region17: #{weighted_l2_loss_2d.1} parent=0 // pred_fallthru
    _
  // Predicated region
  $region18: #{weighted_l2_loss_2d.1} parent=0 // pred_check
    _
  $region19: #{weighted_l2_loss_2d.1} parent=0 // pred_check_branch
    %65 = sbr.rel (0) target = $region21
  $region20: #{weighted_l2_loss_2d.1} parent=0 // pred_region
    _
  $region21: #{weighted_l2_loss_2d.1} parent=0 // pred_fallthru
    _
  // Predicated region
  $region22: #{weighted_l2_loss_2d.1} parent=0 // pred_check
    _
  $region23: #{weighted_l2_loss_2d.1} parent=0 // pred_check_branch
    %67 = sbr.rel (0) target = $region25
  $region24: #{weighted_l2_loss_2d.1} parent=0 // pred_region
    _
  $region25: #{weighted_l2_loss_2d.1} parent=0 // pred_fallthru
    _

</llo_original>
